<compile_context>
chip_gen: v7x
topology: tpu7x:2x2x1
jax: 0.10.0
libtpu: 0.0.40
codegen_flags: <defaults>
</compile_context>

<pallas_src>
import functools

import jax
import jax.numpy as jnp
from jax import lax
from jax.experimental import pallas as pl
from jax.experimental.pallas import tpu as pltpu


def mask_object_kernel(x_ref, w_ref, b_ref, o_ref, *, tile_n):
    # Global out-feature (column) index q for this tile.
    j = pl.program_id(1)
    col = lax.broadcasted_iota(jnp.int32, x_ref.shape, 1) + j * tile_n
    idx = col.astype(jnp.float32)

    # Weight block arrives as (tile_n, tile_m) slice of W (out, in);
    # transpose the small tile in-kernel instead of transposing W in HBM.
    wt = jnp.transpose(w_ref[...].astype(jnp.float32), (1, 0))  # (tile_m, tile_n)

    x = x_ref[...].astype(jnp.float32)
    b = b_ref[...].astype(jnp.float32)                          # (1, tile_n)

    # output = q * (x * W^T + bias)  ==  x * (q*W^T) + q*bias
    o_ref[...] = (idx * (x * wt + b)).astype(o_ref.dtype)


def _round_up(v, m):
    return ((v + m - 1) // m) * m


def _pick_tile(n_padded, pref=512):
    # n_padded is a multiple of 128, so 128 always divides.
    for t in (pref, 256, 128):
        if n_padded % t == 0:
            return t
    return 128


def mask_object_forward(x, weight, bias):
    """x: (in_features, out_features); weight: (out, in); bias: (out,)."""
    in_f, out_f = x.shape
    assert weight.shape == (out_f, in_f)
    dtype = x.dtype

    in_p = _round_up(in_f, 128)
    out_p = _round_up(out_f, 128)
    tile_m = _pick_tile(in_p)
    tile_n = _pick_tile(out_p)

    needs_pad = (in_p, out_p) != (in_f, out_f)
    if needs_pad:
        # Zero padding keeps the padded output region exactly zero.
        x = jnp.pad(x, ((0, in_p - in_f), (0, out_p - out_f)))
        weight = jnp.pad(weight, ((0, out_p - out_f), (0, in_p - in_f)))
        bias = jnp.pad(bias, (0, out_p - out_f))
    b2 = bias.reshape(1, out_p)

    grid = (in_p // tile_m, out_p // tile_n)

    out = pl.pallas_call(
        functools.partial(mask_object_kernel, tile_n=tile_n),
        out_shape=jax.ShapeDtypeStruct((in_p, out_p), dtype),
        grid=grid,
        in_specs=[
            # activations: (tile_m, tile_n) tile of (in, out)
            pl.BlockSpec((tile_m, tile_n), lambda i, j: (i, j)),
            # raw weight (out, in): swap grid indices, transpose in-kernel
            pl.BlockSpec((tile_n, tile_m), lambda i, j: (j, i)),
            # bias row: only the needed 128-lane-aligned slice is resident
            pl.BlockSpec((1, tile_n), lambda i, j: (0, j)),
        ],
        out_specs=pl.BlockSpec((tile_m, tile_n), lambda i, j: (i, j)),
        compiler_params=pltpu.CompilerParams(
            dimension_semantics=("parallel", "parallel")),
    )(x, weight, b2)

    if needs_pad:
        out = out[:in_f, :out_f]
    return out


def reference_forward(x, weight, bias):
    out_f = weight.shape[0]
    # torch.argsort(ones(out)) == identity permutation.
    idx = jnp.arange(out_f, dtype=jnp.float32)
    sparsified_weight = idx[:, None] * weight            # (out, in)
    out = x * sparsified_weight.T                        # (in, out)
    out = out + idx * bias
    return out.astype(x.dtype)


if __name__ == "__main__":
    # TODO(synk): set_mask / layer_name dispatch is pure Python bookkeeping
    # (no tensor work) and is handled outside the kernel.
    key = jax.random.PRNGKey(0)
    k1, k2 = jax.random.split(key)

    # Case 1: lane-aligned Linear-like shapes (multi-tile grid, exercises the
    # per-tile iota offset along the out-feature axis).
    in_f, out_f = 256, 384
    kx, kw, kb = jax.random.split(k1, 3)
    x = jax.random.normal(kx, (in_f, out_f), dtype=jnp.float32)
    w = jax.random.normal(kw, (out_f, in_f), dtype=jnp.float32) * 0.1
    b = jax.random.normal(kb, (out_f,), dtype=jnp.float32) * 0.1

    out = jax.block_until_ready(mask_object_forward(x, w, b))
    ref = reference_forward(x, w, b)
    assert out.shape == (in_f, out_f)
    assert jnp.allclose(out, ref, atol=1e-4, rtol=1e-4)

    # Case 2: small unaligned layer (like nn.Linear(16, 32)) -> wrapper pads
    # to (128, 128) tiles and slices back.
    in_f2, out_f2 = 16, 32
    kx2, kw2, kb2 = jax.random.split(k2, 3)
    x2 = jax.random.normal(kx2, (in_f2, out_f2), dtype=jnp.float32)
    w2 = jax.random.normal(kw2, (out_f2, in_f2), dtype=jnp.float32) * 0.1
    b2 = jax.random.normal(kb2, (out_f2,), dtype=jnp.float32) * 0.1

    out2 = jax.block_until_ready(mask_object_forward(x2, w2, b2))
    ref2 = reference_forward(x2, w2, b2)
    assert out2.shape == (in_f2, out_f2)
    assert jnp.allclose(out2, ref2, atol=1e-4, rtol=1e-4)

    print("KERNEL_OK")
</pallas_src>

<mosaic_0001>
module attributes {stable_mosaic.version = 11 : i64} {
  func.func @mask_object_kernel(%arg0: i32, %arg1: i32, %arg2: memref<256x128xf32, #tpu.memory_space<vmem>>, %arg3: memref<128x256xf32, #tpu.memory_space<vmem>>, %arg4: memref<1x128xf32, #tpu.memory_space<vmem>>, %arg5: memref<256x128xf32, #tpu.memory_space<vmem>>) attributes {dimension_semantics = [#tpu.dimension_semantics<parallel>, #tpu.dimension_semantics<parallel>], iteration_bounds = array<i64: 1, 3>, scalar_prefetch = 0 : i64, scratch_operands = 0 : i64, tpu.core_type = #tpu.core_type<tc>, window_params = [{transform_indices = @transform_0, window_bounds = array<i64: 256, 128>}, {transform_indices = @transform_1, window_bounds = array<i64: 128, 256>}, {transform_indices = @transform_2, window_bounds = array<i64: 1, 128>}, {transform_indices = @transform_3, window_bounds = array<i64: 256, 128>}]} {
    %0 = tpu.iota {dimensions = array<i32: 1>} : vector<256x128xi32>
    %c128_i32 = arith.constant 128 : i32
    %1 = arith.muli %arg1, %c128_i32 : i32
    %2 = vector.broadcast %1 : i32 to vector<256x128xi32>
    %3 = arith.addi %0, %2 : vector<256x128xi32>
    %4 = arith.sitofp %3 : vector<256x128xi32> to vector<256x128xf32>
    %c0 = arith.constant 0 : index
    %c0_0 = arith.constant 0 : index
    %5 = vector.load %arg3[%c0, %c0_0] : memref<128x256xf32, #tpu.memory_space<vmem>>, vector<128x256xf32>
    %6 = tpu.transpose %5, [1, 0] : vector<128x256xf32> -> vector<256x128xf32>
    %c0_1 = arith.constant 0 : index
    %c0_2 = arith.constant 0 : index
    %7 = vector.load %arg2[%c0_1, %c0_2] : memref<256x128xf32, #tpu.memory_space<vmem>>, vector<256x128xf32>
    %c0_3 = arith.constant 0 : index
    %c0_4 = arith.constant 0 : index
    %8 = vector.load %arg4[%c0_3, %c0_4] : memref<1x128xf32, #tpu.memory_space<vmem>>, vector<1x128xf32>
    %9 = arith.mulf %7, %6 : vector<256x128xf32>
    %10 = vector.broadcast %8 : vector<1x128xf32> to vector<256x128xf32>
    %11 = arith.addf %9, %10 : vector<256x128xf32>
    %12 = arith.mulf %4, %11 : vector<256x128xf32>
    %c0_5 = arith.constant 0 : index
    %c0_6 = arith.constant 0 : index
    %13 = vector.load %arg5[%c0_5, %c0_6] : memref<256x128xf32, #tpu.memory_space<vmem>>, vector<256x128xf32>
    tpu.vector_store %arg5[%c0_5, %c0_6], %12 {strides = array<i32>} : memref<256x128xf32, #tpu.memory_space<vmem>>, vector<256x128xf32>,
    return
  }
  func.func @transform_0(%arg0: i32, %arg1: i32) -> (i32, i32) {
    %c0_i32 = arith.constant 0 : i32
    return %arg0, %arg1 : i32, i32
  }
  func.func @transform_1(%arg0: i32, %arg1: i32) -> (i32, i32) {
    %c0_i32 = arith.constant 0 : i32
    return %arg1, %arg0 : i32, i32
  }
  func.func @transform_2(%arg0: i32, %arg1: i32) -> (i32, i32) {
    %c0_i32 = arith.constant 0 : i32
    %c0_i32_0 = arith.constant 0 : i32
    return %c0_i32, %arg1 : i32, i32
  }
  func.func @transform_3(%arg0: i32, %arg1: i32) -> (i32, i32) {
    %c0_i32 = arith.constant 0 : i32
    return %arg0, %arg1 : i32, i32
  }
}

</mosaic_0001>

<llo_original>
// kernel: tpu_custom_call.1
$region0: #{tpu_custom_call.1}
  #allocation0 [shape = 'u32[]', space=smem, size = 0x4, offset = 0x4, fixed_abs, tag = 'smem constant byte address 0x4 - core index']
  #allocation1 [shape = 'u32[144,128]{1,0:T(1,128)}', space=vmem, size = 0x12000, scoped, tag = 'internal scratch']
  %s0 = inlined_call_operand.hbm [shape: f32[256,384], index: 0, kind: input, shape index: {}]
  %s1 = inlined_call_operand.hbm [shape: f32[384,256], index: 1, kind: input, shape index: {}]
  %s2 = inlined_call_operand.vmem [shape: f32[1,384], index: 2, kind: input, shape index: {}]
  %s3 = inlined_call_operand.hbm [shape: f32[256,384], index: 3, kind: output, shape index: {}]
  %s4 = sld [smem:[#allocation0]]
  $region53: #{tpu_custom_call.1} parent=0
    _
  %s6 = ssub.s32 1, %s4
  %s7 = scalar_select 0, %s6, %s4
  $region1: #{tpu_custom_call.1} parent=0
    #allocation2 [shape = 'u8[262144]{0}', space=vmem, size = 0x40000, scoped, tag = 'input window, operand 0']
    #allocation3 [shape = 's32[2]{0}', space=sflag, size = 0x8, scoped, tag = 'scoped memory for tpu_custom_call.1']
    #allocation4 [shape = 's32[2]{0}', space=sflag, size = 0x8, scoped, tag = 'scoped memory for tpu_custom_call.1']
    #allocation5 [shape = 'u8[262144]{0}', space=vmem, size = 0x40000, scoped, tag = 'input window, operand 1']
    #allocation6 [shape = 's32[2]{0}', space=sflag, size = 0x8, scoped, tag = 'scoped memory for tpu_custom_call.1']
    #allocation7 [shape = 'u8[262144]{0}', space=vmem, size = 0x40000, scoped, tag = 'output window, operand 0']
    %8 = vsyncpa [#allocation3], 0
    %s9 = scalar_lea.sflag [#allocation3], 1
    %10 = vsyncpa %s9, 0
    %11 = vsyncpa [#allocation6], 0
    %s12 = scalar_lea.sflag [#allocation6], 1
    %13 = vsyncpa %s12, 0
    %14 = vsyncpa [#allocation4], 0
    %s15 = scalar_lea.sflag [#allocation4], 1
    %16 = vsyncpa %s15, 0
    loop: start=0, step=1, limit=5
    $region2: #{tpu_custom_call.1} parent=1 // loop_pre_header
      _
    $region3: #{tpu_custom_call.1} parent=1 // loop_header
      %s18 = sphi 0, %s22
      %p19 = scmp.ge.s32.totalorder %s18, 5
      %s25 = sphi 0, %s37
      %s26 = sphi 0, %s33
      %s27 = sphi 0, %s25
      %s28 = sphi 0, %s26
      %s29 = sphi 0, %s27
      %s30 = sphi 0, %s28
      %s42 = sphi 0, %s44
      %s45 = sphi 0, %s42
      %s46 = sphi 0, %s45
      %s62 = sphi 0, %s46
      %s70 = sphi 0, %s72
      %s73 = sphi 0, %s70
      %s74 = sphi 0, %s73
      %s90 = sphi 0, %s74
      %s96 = sphi 0, %s98
      %s99 = sphi 0, %s96
      %s100 = sphi 0, %s99
      %s116 = sphi 0, %s100
      %s124 = sphi 0, %s126
      %s127 = sphi 0, %s124
      %s128 = sphi 0, %s127
      %s144 = sphi 0, %s128
    $region4: #{tpu_custom_call.1} parent=1 // loop_header_branch
      %21 = sbr.rel (%p19) target = $region8
    $region5: #{tpu_custom_call.1} parent=1 // loop_body
      %s23 = ssub.s32 %s18, 1
      %s24 = ssub.s32 %s18, 2
      %s31 = sadd.s32 1, %s26
      %p32 = scmp.ge.s32.totalorder %s31, 3
      %s33 = scalar_select %p32, 0, %s31
      %s34 = sadd.s32 1, %s25
      %s35 = scalar_select %p32, %s34, %s25
      %p36 = scmp.ge.s32.totalorder %s35, 1
      %s37 = scalar_select %p36, 0, %s35
      %s38 = ssub.s32 %s25, %s37
      %s39 = ssub.s32 %s26, %s33
      %s40 = sor.u32 %s38, %s39
      %p41 = scmp.eq.s32.totalorder %s40, 0
      %s43 = sadd.s32 %s42, 1
      %s44 = scalar_select %p41, %s42, %s43
      %p47 = pneg %p41
      %p48 = scmp.eq.s32.totalorder %s18, 2
      %p49 = por %p47, %p48
      %p50 = scmp.ne.s32.totalorder %s42, %s45
      %p51 = scmp.eq.s32.totalorder %s18, 0
      %p52 = por %p50, %p51
      %p53 = scmp.ne.s32.totalorder %s42, %s45
      %p54 = scmp.eq.s32.totalorder %s23, 2
      %p55 = por %p53, %p54
      %p56 = scmp.ne.s32.totalorder %s45, %s46
      %p57 = scmp.eq.s32.totalorder %s23, 0
      %p58 = por %p56, %p57
      %p59 = scmp.ne.s32.totalorder %s45, %s46
      %p60 = scmp.eq.s32.totalorder %s24, 2
      %p61 = por %p59, %p60
      %p63 = scmp.ne.s32.totalorder %s46, %s62
      %p64 = scmp.eq.s32.totalorder %s24, 0
      %p65 = por %p63, %p64
      %s66 = ssub.s32 %s26, %s33
      %s67 = ssub.s32 %s25, %s37
      %s68 = sor.u32 %s66, %s67
      %p69 = scmp.eq.s32.totalorder %s68, 0
      %s71 = sadd.s32 %s70, 1
      %s72 = scalar_select %p69, %s70, %s71
      %p75 = pneg %p69
      %p76 = scmp.eq.s32.totalorder %s18, 2
      %p77 = por %p75, %p76
      %p78 = scmp.ne.s32.totalorder %s70, %s73
      %p79 = scmp.eq.s32.totalorder %s18, 0
      %p80 = por %p78, %p79
      %p81 = scmp.ne.s32.totalorder %s70, %s73
      %p82 = scmp.eq.s32.totalorder %s23, 2
      %p83 = por %p81, %p82
      %p84 = scmp.ne.s32.totalorder %s73, %s74
      %p85 = scmp.eq.s32.totalorder %s23, 0
      %p86 = por %p84, %p85
      %p87 = scmp.ne.s32.totalorder %s73, %s74
      %p88 = scmp.eq.s32.totalorder %s24, 2
      %p89 = por %p87, %p88
      %p91 = scmp.ne.s32.totalorder %s74, %s90
      %p92 = scmp.eq.s32.totalorder %s24, 0
      %p93 = por %p91, %p92
      %s94 = ssub.s32 %s26, %s33
      %p95 = scmp.eq.s32.totalorder %s94, 0
      %s97 = sadd.s32 %s96, 1
      %s98 = scalar_select %p95, %s96, %s97
      %p101 = pneg %p95
      %p102 = scmp.eq.s32.totalorder %s18, 2
      %p103 = por %p101, %p102
      %p104 = scmp.ne.s32.totalorder %s96, %s99
      %p105 = scmp.eq.s32.totalorder %s18, 0
      %p106 = por %p104, %p105
      %p107 = scmp.ne.s32.totalorder %s96, %s99
      %p108 = scmp.eq.s32.totalorder %s23, 2
      %p109 = por %p107, %p108
      %p110 = scmp.ne.s32.totalorder %s99, %s100
      %p111 = scmp.eq.s32.totalorder %s23, 0
      %p112 = por %p110, %p111
      %p113 = scmp.ne.s32.totalorder %s99, %s100
      %p114 = scmp.eq.s32.totalorder %s24, 2
      %p115 = por %p113, %p114
      %p117 = scmp.ne.s32.totalorder %s100, %s116
      %p118 = scmp.eq.s32.totalorder %s24, 0
      %p119 = por %p117, %p118
      %s120 = ssub.s32 %s25, %s37
      %s121 = ssub.s32 %s26, %s33
      %s122 = sor.u32 %s120, %s121
      %p123 = scmp.eq.s32.totalorder %s122, 0
      %s125 = sadd.s32 %s124, 1
      %s126 = scalar_select %p123, %s124, %s125
      %p129 = pneg %p123
      %p130 = scmp.eq.s32.totalorder %s18, 2
      %p131 = por %p129, %p130
      %p132 = scmp.ne.s32.totalorder %s124, %s127
      %p133 = scmp.eq.s32.totalorder %s18, 0
      %p134 = por %p132, %p133
      %p135 = scmp.ne.s32.totalorder %s124, %s127
      %p136 = scmp.eq.s32.totalorder %s23, 2
      %p137 = por %p135, %p136
      %p138 = scmp.ne.s32.totalorder %s127, %s128
      %p139 = scmp.eq.s32.totalorder %s23, 0
      %p140 = por %p138, %p139
      %p141 = scmp.ne.s32.totalorder %s127, %s128
      %p142 = scmp.eq.s32.totalorder %s24, 2
      %p143 = por %p141, %p142
      %p145 = scmp.ne.s32.totalorder %s128, %s144
      %p146 = scmp.eq.s32.totalorder %s24, 0
      %p147 = por %p145, %p146
      %p148 = scmp.le.s32.totalorder 1, %s18
      %p149 = scmp.lt.s32.totalorder %s18, 4
      %p150 = pnand %p148, %p149
      %p151 = pneg %p150
      // Predicated region
      $region9: #{tpu_custom_call.1} parent=5 // pred_check
        _
      $region10: #{tpu_custom_call.1} parent=5 // pred_check_branch
        %153 = sbr.rel (%p150) target = $region12
      $region11: #{tpu_custom_call.1} parent=5 // pred_region
        %s154 = ssub.s32 %s18, 1
      $region12: #{tpu_custom_call.1} parent=5 // pred_fallthru
        _
      %p155 = scmp.lt.s32.totalorder %s18, 3
      // Predicated region
      $region13: #{tpu_custom_call.1} parent=5 // pred_check
        %p156 = pneg %p155
      $region14: #{tpu_custom_call.1} parent=5 // pred_check_branch
        %158 = sbr.rel (%p156) target = $region16
      $region15: #{tpu_custom_call.1} parent=5 // pred_region
        // Predicated region
        $region17: #{tpu_custom_call.1} parent=15 // pred_check
          %p159 = pneg %p52
        $region18: #{tpu_custom_call.1} parent=15 // pred_check_branch
          %161 = sbr.rel (%p159) target = $region20
        $region19: #{tpu_custom_call.1} parent=15 // pred_region
          %s162 = sand.u32 %s42, 1
          %s163 = scalar_lea.sflag [#allocation3], %s162
          %s164 = sand.u32 %s42, 1
          %s165 = smul.addr %s164, 256
          %s166 = scalar_lea.vmem [#allocation2], %s165
          %s167 = smul.u32 32, %s25
          %s169 = ssub.s32 4096, 4096
          %170 = vsyncadd %s163, %s169
          %s171 = smul.addr %s167, 3
          %s172 = sadd.s32 %s26, %s171
          %s173 = smul.addr %s172, 128
          %s174 = scalar_lea.hbm %s0, %s173
          %s175 = sshll.u32 %s166, 4
          %s176 = int_to_ptr.vmem [resolvable:$true] %s175
          %181 = dma.hbm_to_vmem [thread:$0]  %s174, 4096, %s176, %s163, 384, 128, 8
        $region20: #{tpu_custom_call.1} parent=15 // pred_fallthru
          _
        // Predicated region
        $region21: #{tpu_custom_call.1} parent=15 // pred_check
          %p182 = pneg %p80
        $region22: #{tpu_custom_call.1} parent=15 // pred_check_branch
          %184 = sbr.rel (%p182) target = $region24
        $region23: #{tpu_custom_call.1} parent=15 // pred_region
          %s185 = sand.u32 %s70, 1
          %s186 = scalar_lea.sflag [#allocation6], %s185
          %s187 = sand.u32 %s70, 1
          %s188 = smul.addr %s187, 256
          %s189 = scalar_lea.vmem [#allocation5], %s188
          %s190 = smul.u32 16, %s26
          %s191 = smul.u32 2, %s25
          %s193 = ssub.s32 4096, 4096
          %194 = vsyncadd %s186, %s193
          %s195 = smul.addr %s190, 2
          %s196 = sadd.s32 %s191, %s195
          %s197 = smul.addr %s196, 128
          %s198 = scalar_lea.hbm %s1, %s197
          %s199 = sshll.u32 %s189, 4
          %s200 = int_to_ptr.vmem [resolvable:$true] %s199
          %205 = dma.hbm_to_vmem [thread:$0]  %s198, 4096, %s200, %s186, 256, 256, 16
        $region24: #{tpu_custom_call.1} parent=15 // pred_fallthru
          _
        // Predicated region
        $region25: #{tpu_custom_call.1} parent=15 // pred_check
          %p206 = pneg %p106
        $region26: #{tpu_custom_call.1} parent=15 // pred_check_branch
          %208 = sbr.rel (%p206) target = $region28
        $region27: #{tpu_custom_call.1} parent=15 // pred_region
          %p209 = scmp.lt.s32.totalorder %s26, 2
          %s210 = scalar_select %p209, %s26, 2
          %s211 = scalar_lea.vmem %s2, %s210
        $region28: #{tpu_custom_call.1} parent=15 // pred_fallthru
          _
      $region16: #{tpu_custom_call.1} parent=5 // pred_fallthru
        _
      %p212 = scmp.le.s32.totalorder 1, %s18
      %p213 = scmp.lt.s32.totalorder %s18, 4
      %p214 = pnand %p212, %p213
      %p215 = pneg %p214
      // Predicated region
      $region29: #{tpu_custom_call.1} parent=5 // pred_check
        _
      $region30: #{tpu_custom_call.1} parent=5 // pred_check_branch
        %217 = sbr.rel (%p214) target = $region32
      $region31: #{tpu_custom_call.1} parent=5 // pred_region
        %s218 = ssub.s32 %s18, 1
        %s219 = sand.u32 %s45, 1
        %s220 = scalar_lea.sflag [#allocation3], %s219
        %s221 = sand.u32 %s45, 1
        %s222 = smul.addr %s221, 256
        %s223 = scalar_lea.vmem [#allocation2], %s222
        // Predicated region
        $region33: #{tpu_custom_call.1} parent=31 // pred_check
          %p224 = pneg %p58
        $region34: #{tpu_custom_call.1} parent=31 // pred_check_branch
          %226 = sbr.rel (%p224) target = $region36
        $region35: #{tpu_custom_call.1} parent=31 // pred_region
          %227 = dma.done %s220, 4096
        $region36: #{tpu_custom_call.1} parent=31 // pred_fallthru
          _
        %s228 = sand.u32 %s73, 1
        %s229 = scalar_lea.sflag [#allocation6], %s228
        %s230 = sand.u32 %s73, 1
        %s231 = smul.addr %s230, 256
        %s232 = scalar_lea.vmem [#allocation5], %s231
        // Predicated region
        $region37: #{tpu_custom_call.1} parent=31 // pred_check
          %p233 = pneg %p86
        $region38: #{tpu_custom_call.1} parent=31 // pred_check_branch
          %235 = sbr.rel (%p233) target = $region40
        $region39: #{tpu_custom_call.1} parent=31 // pred_region
          %236 = dma.done %s229, 4096
        $region40: #{tpu_custom_call.1} parent=31 // pred_fallthru
          _
        %s237 = sand.u32 %s45, 1
        %s238 = scalar_lea.sflag [#allocation3], %s237
        %s239 = sand.u32 %s45, 1
        %s240 = smul.addr %s239, 256
        %s241 = scalar_lea.vmem [#allocation2], %s240
        %p242 = pneg %p58
        %p243 = pneg %p55
        %s244 = sand.u32 %s73, 1
        %s245 = scalar_lea.sflag [#allocation6], %s244
        %s246 = sand.u32 %s73, 1
        %s247 = smul.addr %s246, 256
        %s248 = scalar_lea.vmem [#allocation5], %s247
        %p249 = pneg %p86
        %p250 = pneg %p83
        %p251 = scmp.lt.s32.totalorder %s28, 2
        %s252 = scalar_select %p251, %s28, 2
        %s253 = scalar_lea.vmem %s2, %s252
        %p254 = pneg %p112
        %p255 = pneg %p109
        %p256 = pneg %p140
        %p257 = pneg %p137
        %s258 = sand.u32 %s127, 1
        %s259 = scalar_lea.sflag [#allocation4], %s258
        %s260 = sand.u32 %s127, 1
        %s261 = smul.addr %s260, 256
        %s262 = scalar_lea.vmem [#allocation7], %s261
        %s263 = smul.u32 32, %s27
        %s264 = smul.u32 16, %s28
        %s265 = smul.u32 2, %s27
        %p266 = scmp.lt.s32.totalorder %s28, 2
        %s267 = scalar_select %p266, %s28, 2
        %s268 = scalar_lea.vmem %s2, %s267
        %s269 = smul.u32 32, %s27
        %v270 = vlaneseq
        %v271 = vand.u32 %v270, 127
        %s272 = smul.u32 %s28, 128
        %v273 = vstv %s272
        %v274 = vadd.s32 %v271, %v273
        %v275 = vcvt.s32.f32 %v274
        %v276 = vld [vmem:[%s232] sm:$0xff]
        %v277 = vld [vmem:[%s232 + $0x8] sm:$0xff]
        %v278 = vld [vmem:[%s232 + $0x10] sm:$0xff]
        %v279 = vld [vmem:[%s232 + $0x18] sm:$0xff]
        %v280 = vld [vmem:[%s232 + $0x20] sm:$0xff]
        %v281 = vld [vmem:[%s232 + $0x28] sm:$0xff]
        %v282 = vld [vmem:[%s232 + $0x30] sm:$0xff]
        %v283 = vld [vmem:[%s232 + $0x38] sm:$0xff]
        %v284 = vld [vmem:[%s232 + $0x40] sm:$0xff]
        %v285 = vld [vmem:[%s232 + $0x48] sm:$0xff]
        %v286 = vld [vmem:[%s232 + $0x50] sm:$0xff]
        %v287 = vld [vmem:[%s232 + $0x58] sm:$0xff]
        %v288 = vld [vmem:[%s232 + $0x60] sm:$0xff]
        %v289 = vld [vmem:[%s232 + $0x68] sm:$0xff]
        %v290 = vld [vmem:[%s232 + $0x70] sm:$0xff]
        %v291 = vld [vmem:[%s232 + $0x78] sm:$0xff]
        %v292 = vld [vmem:[%s232 + $0x80] sm:$0xff]
        %v293 = vld [vmem:[%s232 + $0x88] sm:$0xff]
        %v294 = vld [vmem:[%s232 + $0x90] sm:$0xff]
        %v295 = vld [vmem:[%s232 + $0x98] sm:$0xff]
        %v296 = vld [vmem:[%s232 + $0xa0] sm:$0xff]
        %v297 = vld [vmem:[%s232 + $0xa8] sm:$0xff]
        %v298 = vld [vmem:[%s232 + $0xb0] sm:$0xff]
        %v299 = vld [vmem:[%s232 + $0xb8] sm:$0xff]
        %v300 = vld [vmem:[%s232 + $0xc0] sm:$0xff]
        %v301 = vld [vmem:[%s232 + $0xc8] sm:$0xff]
        %v302 = vld [vmem:[%s232 + $0xd0] sm:$0xff]
        %v303 = vld [vmem:[%s232 + $0xd8] sm:$0xff]
        %v304 = vld [vmem:[%s232 + $0xe0] sm:$0xff]
        %v305 = vld [vmem:[%s232 + $0xe8] sm:$0xff]
        %v306 = vld [vmem:[%s232 + $0xf0] sm:$0xff]
        %v307 = vld [vmem:[%s232 + $0xf8] sm:$0xff]
        %308 = vxpose.xlu0.b32.start [1/16] %v276, 128
        %309 = vxpose.xlu0.b32.cont [2/16] %v278, 128
        %310 = vxpose.xlu0.b32.cont [3/16] %v280, 128
        %311 = vxpose.xlu0.b32.cont [4/16] %v282, 128
        %312 = vxpose.xlu0.b32.cont [5/16] %v284, 128
        %313 = vxpose.xlu0.b32.cont [6/16] %v286, 128
        %314 = vxpose.xlu0.b32.cont [7/16] %v288, 128
        %315 = vxpose.xlu0.b32.cont [8/16] %v290, 128
        %316 = vxpose.xlu0.b32.cont [9/16] %v292, 128
        %317 = vxpose.xlu0.b32.cont [10/16] %v294, 128
        %318 = vxpose.xlu0.b32.cont [11/16] %v296, 128
        %319 = vxpose.xlu0.b32.cont [12/16] %v298, 128
        %320 = vxpose.xlu0.b32.cont [13/16] %v300, 128
        %321 = vxpose.xlu0.b32.cont [14/16] %v302, 128
        %322 = vxpose.xlu0.b32.cont [15/16] %v304, 128
        %323 = vxpose.xlu0.b32.end [16/16] %v306, 128
        %v324 = vpop.trf.xlu0
        %v325 = vpop.trf.xlu0
        %v326 = vpop.trf.xlu0
        %v327 = vpop.trf.xlu0
        %v328 = vpop.trf.xlu0
        %v329 = vpop.trf.xlu0
        %v330 = vpop.trf.xlu0
        %v331 = vpop.trf.xlu0
        %v332 = vpop.trf.xlu0
        %v333 = vpop.trf.xlu0
        %v334 = vpop.trf.xlu0
        %v335 = vpop.trf.xlu0
        %v336 = vpop.trf.xlu0
        %v337 = vpop.trf.xlu0
        %v338 = vpop.trf.xlu0
        %v339 = vpop.trf.xlu0
        %340 = vxpose.xlu0.b32.start [1/16] %v277, 128
        %341 = vxpose.xlu0.b32.cont [2/16] %v279, 128
        %342 = vxpose.xlu0.b32.cont [3/16] %v281, 128
        %343 = vxpose.xlu0.b32.cont [4/16] %v283, 128
        %344 = vxpose.xlu0.b32.cont [5/16] %v285, 128
        %345 = vxpose.xlu0.b32.cont [6/16] %v287, 128
        %346 = vxpose.xlu0.b32.cont [7/16] %v289, 128
        %347 = vxpose.xlu0.b32.cont [8/16] %v291, 128
        %348 = vxpose.xlu0.b32.cont [9/16] %v293, 128
        %349 = vxpose.xlu0.b32.cont [10/16] %v295, 128
        %350 = vxpose.xlu0.b32.cont [11/16] %v297, 128
        %351 = vxpose.xlu0.b32.cont [12/16] %v299, 128
        %352 = vxpose.xlu0.b32.cont [13/16] %v301, 128
        %353 = vxpose.xlu0.b32.cont [14/16] %v303, 128
        %354 = vxpose.xlu0.b32.cont [15/16] %v305, 128
        %355 = vxpose.xlu0.b32.end [16/16] %v307, 128
        %v356 = vpop.trf.xlu0
        %v357 = vpop.trf.xlu0
        %v358 = vpop.trf.xlu0
        %v359 = vpop.trf.xlu0
        %v360 = vpop.trf.xlu0
        %v361 = vpop.trf.xlu0
        %v362 = vpop.trf.xlu0
        %v363 = vpop.trf.xlu0
        %v364 = vpop.trf.xlu0
        %v365 = vpop.trf.xlu0
        %v366 = vpop.trf.xlu0
        %v367 = vpop.trf.xlu0
        %v368 = vpop.trf.xlu0
        %v369 = vpop.trf.xlu0
        %v370 = vpop.trf.xlu0
        %v371 = vpop.trf.xlu0
        %v372 = vld [vmem:[%s223] sm:$0xff]
        %v373 = vld [vmem:[%s223 + $0x8] sm:$0xff]
        %v374 = vld [vmem:[%s223 + $0x10] sm:$0xff]
        %v375 = vld [vmem:[%s223 + $0x18] sm:$0xff]
        %v376 = vld [vmem:[%s223 + $0x20] sm:$0xff]
        %v377 = vld [vmem:[%s223 + $0x28] sm:$0xff]
        %v378 = vld [vmem:[%s223 + $0x30] sm:$0xff]
        %v379 = vld [vmem:[%s223 + $0x38] sm:$0xff]
        %v380 = vld [vmem:[%s223 + $0x40] sm:$0xff]
        %v381 = vld [vmem:[%s223 + $0x48] sm:$0xff]
        %v382 = vld [vmem:[%s223 + $0x50] sm:$0xff]
        %v383 = vld [vmem:[%s223 + $0x58] sm:$0xff]
        %v384 = vld [vmem:[%s223 + $0x60] sm:$0xff]
        %v385 = vld [vmem:[%s223 + $0x68] sm:$0xff]
        %v386 = vld [vmem:[%s223 + $0x70] sm:$0xff]
        %v387 = vld [vmem:[%s223 + $0x78] sm:$0xff]
        %v388 = vld [vmem:[%s223 + $0x80] sm:$0xff]
        %v389 = vld [vmem:[%s223 + $0x88] sm:$0xff]
        %v390 = vld [vmem:[%s223 + $0x90] sm:$0xff]
        %v391 = vld [vmem:[%s223 + $0x98] sm:$0xff]
        %v392 = vld [vmem:[%s223 + $0xa0] sm:$0xff]
        %v393 = vld [vmem:[%s223 + $0xa8] sm:$0xff]
        %v394 = vld [vmem:[%s223 + $0xb0] sm:$0xff]
        %v395 = vld [vmem:[%s223 + $0xb8] sm:$0xff]
        %v396 = vld [vmem:[%s223 + $0xc0] sm:$0xff]
        %v397 = vld [vmem:[%s223 + $0xc8] sm:$0xff]
        %v398 = vld [vmem:[%s223 + $0xd0] sm:$0xff]
        %v399 = vld [vmem:[%s223 + $0xd8] sm:$0xff]
        %v400 = vld [vmem:[%s223 + $0xe0] sm:$0xff]
        %v401 = vld [vmem:[%s223 + $0xe8] sm:$0xff]
        %v402 = vld [vmem:[%s223 + $0xf0] sm:$0xff]
        %v403 = vld [vmem:[%s223 + $0xf8] sm:$0xff]
        %v404 = vld [vmem:[%s268] sm:$0x1]
        %v405 = vmul.f32 %v372, %v324
        %v406 = vmul.f32 %v373, %v325
        %v407 = vmul.f32 %v374, %v326
        %v408 = vmul.f32 %v375, %v327
        %v409 = vmul.f32 %v376, %v328
        %v410 = vmul.f32 %v377, %v329
        %v411 = vmul.f32 %v378, %v330
        %v412 = vmul.f32 %v379, %v331
        %v413 = vmul.f32 %v380, %v332
        %v414 = vmul.f32 %v381, %v333
        %v415 = vmul.f32 %v382, %v334
        %v416 = vmul.f32 %v383, %v335
        %v417 = vmul.f32 %v384, %v336
        %v418 = vmul.f32 %v385, %v337
        %v419 = vmul.f32 %v386, %v338
        %v420 = vmul.f32 %v387, %v339
        %v421 = vmul.f32 %v388, %v356
        %v422 = vmul.f32 %v389, %v357
        %v423 = vmul.f32 %v390, %v358
        %v424 = vmul.f32 %v391, %v359
        %v425 = vmul.f32 %v392, %v360
        %v426 = vmul.f32 %v393, %v361
        %v427 = vmul.f32 %v394, %v362
        %v428 = vmul.f32 %v395, %v363
        %v429 = vmul.f32 %v396, %v364
        %v430 = vmul.f32 %v397, %v365
        %v431 = vmul.f32 %v398, %v366
        %v432 = vmul.f32 %v399, %v367
        %v433 = vmul.f32 %v400, %v368
        %v434 = vmul.f32 %v401, %v369
        %v435 = vmul.f32 %v402, %v370
        %v436 = vmul.f32 %v403, %v371
        %v438 = vlaneseq
        %v439 = vshrl.u32 %v438, 7
        %v440 = vsub.s32 0, %v439
        %v441 = vrot.slane %v404, %v440
        %v443 = vadd.f32 %v405, %v441
        %v444 = vadd.f32 %v406, %v441
        %v445 = vadd.f32 %v407, %v441
        %v446 = vadd.f32 %v408, %v441
        %v447 = vadd.f32 %v409, %v441
        %v448 = vadd.f32 %v410, %v441
        %v449 = vadd.f32 %v411, %v441
        %v450 = vadd.f32 %v412, %v441
        %v451 = vadd.f32 %v413, %v441
        %v452 = vadd.f32 %v414, %v441
        %v453 = vadd.f32 %v415, %v441
        %v454 = vadd.f32 %v416, %v441
        %v455 = vadd.f32 %v417, %v441
        %v456 = vadd.f32 %v418, %v441
        %v457 = vadd.f32 %v419, %v441
        %v458 = vadd.f32 %v420, %v441
        %v459 = vadd.f32 %v421, %v441
        %v460 = vadd.f32 %v422, %v441
        %v461 = vadd.f32 %v423, %v441
        %v462 = vadd.f32 %v424, %v441
        %v463 = vadd.f32 %v425, %v441
        %v464 = vadd.f32 %v426, %v441
        %v465 = vadd.f32 %v427, %v441
        %v466 = vadd.f32 %v428, %v441
        %v467 = vadd.f32 %v429, %v441
        %v468 = vadd.f32 %v430, %v441
        %v469 = vadd.f32 %v431, %v441
        %v470 = vadd.f32 %v432, %v441
        %v471 = vadd.f32 %v433, %v441
        %v472 = vadd.f32 %v434, %v441
        %v473 = vadd.f32 %v435, %v441
        %v474 = vadd.f32 %v436, %v441
        %v475 = vmul.f32 %v275, %v443
        %v476 = vmul.f32 %v275, %v444
        %v477 = vmul.f32 %v275, %v445
        %v478 = vmul.f32 %v275, %v446
        %v479 = vmul.f32 %v275, %v447
        %v480 = vmul.f32 %v275, %v448
        %v481 = vmul.f32 %v275, %v449
        %v482 = vmul.f32 %v275, %v450
        %v483 = vmul.f32 %v275, %v451
        %v484 = vmul.f32 %v275, %v452
        %v485 = vmul.f32 %v275, %v453
        %v486 = vmul.f32 %v275, %v454
        %v487 = vmul.f32 %v275, %v455
        %v488 = vmul.f32 %v275, %v456
        %v489 = vmul.f32 %v275, %v457
        %v490 = vmul.f32 %v275, %v458
        %v491 = vmul.f32 %v275, %v459
        %v492 = vmul.f32 %v275, %v460
        %v493 = vmul.f32 %v275, %v461
        %v494 = vmul.f32 %v275, %v462
        %v495 = vmul.f32 %v275, %v463
        %v496 = vmul.f32 %v275, %v464
        %v497 = vmul.f32 %v275, %v465
        %v498 = vmul.f32 %v275, %v466
        %v499 = vmul.f32 %v275, %v467
        %v500 = vmul.f32 %v275, %v468
        %v501 = vmul.f32 %v275, %v469
        %v502 = vmul.f32 %v275, %v470
        %v503 = vmul.f32 %v275, %v471
        %v504 = vmul.f32 %v275, %v472
        %v505 = vmul.f32 %v275, %v473
        %v506 = vmul.f32 %v275, %v474
        %507 = vst [vmem:[%s262] sm:$0xff] %v475
        %508 = vst [vmem:[%s262 + $0x8] sm:$0xff] %v476
        %509 = vst [vmem:[%s262 + $0x10] sm:$0xff] %v477
        %510 = vst [vmem:[%s262 + $0x18] sm:$0xff] %v478
        %511 = vst [vmem:[%s262 + $0x20] sm:$0xff] %v479
        %512 = vst [vmem:[%s262 + $0x28] sm:$0xff] %v480
        %513 = vst [vmem:[%s262 + $0x30] sm:$0xff] %v481
        %514 = vst [vmem:[%s262 + $0x38] sm:$0xff] %v482
        %515 = vst [vmem:[%s262 + $0x40] sm:$0xff] %v483
        %516 = vst [vmem:[%s262 + $0x48] sm:$0xff] %v484
        %517 = vst [vmem:[%s262 + $0x50] sm:$0xff] %v485
        %518 = vst [vmem:[%s262 + $0x58] sm:$0xff] %v486
        %519 = vst [vmem:[%s262 + $0x60] sm:$0xff] %v487
        %520 = vst [vmem:[%s262 + $0x68] sm:$0xff] %v488
        %521 = vst [vmem:[%s262 + $0x70] sm:$0xff] %v489
        %522 = vst [vmem:[%s262 + $0x78] sm:$0xff] %v490
        %523 = vst [vmem:[%s262 + $0x80] sm:$0xff] %v491
        %524 = vst [vmem:[%s262 + $0x88] sm:$0xff] %v492
        %525 = vst [vmem:[%s262 + $0x90] sm:$0xff] %v493
        %526 = vst [vmem:[%s262 + $0x98] sm:$0xff] %v494
        %527 = vst [vmem:[%s262 + $0xa0] sm:$0xff] %v495
        %528 = vst [vmem:[%s262 + $0xa8] sm:$0xff] %v496
        %529 = vst [vmem:[%s262 + $0xb0] sm:$0xff] %v497
        %530 = vst [vmem:[%s262 + $0xb8] sm:$0xff] %v498
        %531 = vst [vmem:[%s262 + $0xc0] sm:$0xff] %v499
        %532 = vst [vmem:[%s262 + $0xc8] sm:$0xff] %v500
        %533 = vst [vmem:[%s262 + $0xd0] sm:$0xff] %v501
        %534 = vst [vmem:[%s262 + $0xd8] sm:$0xff] %v502
        %535 = vst [vmem:[%s262 + $0xe0] sm:$0xff] %v503
        %536 = vst [vmem:[%s262 + $0xe8] sm:$0xff] %v504
        %537 = vst [vmem:[%s262 + $0xf0] sm:$0xff] %v505
        %538 = vst [vmem:[%s262 + $0xf8] sm:$0xff] %v506
        %s539 = sand.u32 %s127, 1
        %s540 = scalar_lea.sflag [#allocation4], %s539
        %s541 = sand.u32 %s127, 1
        %s542 = smul.addr %s541, 256
        %s543 = scalar_lea.vmem [#allocation7], %s542
        // Predicated region
        $region41: #{tpu_custom_call.1} parent=31 // pred_check
          %p544 = pneg %p137
        $region42: #{tpu_custom_call.1} parent=31 // pred_check_branch
          %546 = sbr.rel (%p544) target = $region44
        $region43: #{tpu_custom_call.1} parent=31 // pred_region
          %s547 = smul.u32 32, %s27
          %s549 = ssub.s32 4096, 4096
          %550 = vsyncadd %s540, %s549
          %s551 = smul.addr %s547, 3
          %s552 = sadd.s32 %s28, %s551
          %s553 = smul.addr %s552, 128
          %s554 = scalar_lea.hbm %s3, %s553
          %s555 = sshll.u32 %s543, 4
          %s556 = int_to_ptr.vmem [resolvable:$true] %s555
          %561 = dma.vmem_to_hbm [thread:$0]  %s556, 4096, %s554, %s540, 128, 384, 8
        $region44: #{tpu_custom_call.1} parent=31 // pred_fallthru
          _
      $region32: #{tpu_custom_call.1} parent=5 // pred_fallthru
        _
      %p562 = scmp.le.s32.totalorder 2, %s18
      // Predicated region
      $region45: #{tpu_custom_call.1} parent=5 // pred_check
        %p563 = pneg %p562
      $region46: #{tpu_custom_call.1} parent=5 // pred_check_branch
        %565 = sbr.rel (%p563) target = $region48
      $region47: #{tpu_custom_call.1} parent=5 // pred_region
        %s566 = ssub.s32 %s18, 2
        // Predicated region
        $region49: #{tpu_custom_call.1} parent=47 // pred_check
          %p567 = pneg %p143
        $region50: #{tpu_custom_call.1} parent=47 // pred_check_branch
          %569 = sbr.rel (%p567) target = $region52
        $region51: #{tpu_custom_call.1} parent=47 // pred_region
          %s570 = sand.u32 %s128, 1
          %s571 = scalar_lea.sflag [#allocation4], %s570
          %s572 = sand.u32 %s128, 1
          %s573 = smul.addr %s572, 256
          %s574 = scalar_lea.vmem [#allocation7], %s573
          %575 = dma.done %s571, 4096
        $region52: #{tpu_custom_call.1} parent=47 // pred_fallthru
          _
      $region48: #{tpu_custom_call.1} parent=5 // pred_fallthru
        _
    $region6: #{tpu_custom_call.1} parent=1 // loop_footer
      %s22 = sadd.s32 1, %s18
    $region7: #{tpu_custom_call.1} parent=1 // loop_footer_branch
      %17 = sbr.rel target = $region3
    $region8: #{tpu_custom_call.1} parent=1 // loop_exit
      _
    %576 = vsyncpa [#allocation3], 1
    %s577 = scalar_lea.sflag [#allocation3], 1
    %578 = vsyncpa %s577, 1
    %579 = vsyncpa [#allocation6], 1
    %s580 = scalar_lea.sflag [#allocation6], 1
    %581 = vsyncpa %s580, 1
    %582 = vsyncpa [#allocation4], 1
    %s583 = scalar_lea.sflag [#allocation4], 1
    %584 = vsyncpa %s583, 1

</llo_original>
